<compile_context>
chip_gen: v7x
topology: tpu7x:2x2x1
jax: 0.10.0
libtpu: 0.0.40
codegen_flags: <defaults>
</compile_context>

<pallas_src>
import functools

import jax
import jax.numpy as jnp
from jax import lax
from jax.experimental import pallas as pl
from jax.experimental.pallas import tpu as pltpu


# ----------------------------------------------------------------------------
# Kernels
# ----------------------------------------------------------------------------
def _kv_proj_kernel(kv_ref, wk_ref, wv_ref, k_ref, v_ref):
    """K/V projection for one (batch, Skv-tile): k = kv @ Wk^T, v = kv @ Wv^T."""
    # No eager f32 upcast of the kv tile: cast straight to the MXU operand dtype.
    kvs = kv_ref[...].astype(wk_ref.dtype)                        # [TKV, H]
    k_ref[...] = jnp.dot(kvs, wk_ref[...],
                         preferred_element_type=jnp.float32).astype(k_ref.dtype)
    v_ref[...] = jnp.dot(kvs, wv_ref[...],
                         preferred_element_type=jnp.float32).astype(v_ref.dtype)


def _cross_attn_kernel(hid_ref, k_ref, v_ref, lnw_ref, lnb_ref, wq_ref, wo_ref,
                       out_ref, attn_scratch, *, n_heads, d_kv, eps):
    """LayerNorm + Q projection + per-head attention + output proj + residual
    for one (batch, Sq-tile)."""
    mxu_dtype = wq_ref.dtype

    # x kept in f32: needed for LN statistics and for the exact residual add.
    x = hid_ref[...].astype(jnp.float32)                          # [TQ, H]
    lnw = lnw_ref[...].astype(jnp.float32)                        # [1, H]
    lnb = lnb_ref[...].astype(jnp.float32)                        # [1, H]

    # ---- Pix2StructLayerNorm == nn.LayerNorm (mean + biased var), f32 math ----
    mean = jnp.mean(x, axis=-1, keepdims=True)
    var = jnp.mean((x - mean) ** 2, axis=-1, keepdims=True)
    normed = (x - mean) * lax.rsqrt(var + eps)
    normed = normed * lnw + lnb

    # ---- Q projection (no bias): bf16 MXU operands, f32 accumulation ----
    q = jnp.dot(normed.astype(mxu_dtype), wq_ref[...],
                preferred_element_type=jnp.float32)               # [TQ, H] f32

    k = k_ref[...]                                                # [Skv, H] mxu dtype
    v = v_ref[...]                                                # [Skv, H] mxu dtype

    # ---- per-head attention (T5 style: no score scaling) ----
    # Each head writes directly into the attn scratch slab (no concatenate).
    for h in range(n_heads):                                      # static unroll
        lo = h * d_kv
        qh = q[:, lo:lo + d_kv].astype(mxu_dtype)                 # [TQ,  dk]
        kh = k[:, lo:lo + d_kv]                                   # [Skv, dk]
        vh = v[:, lo:lo + d_kv]                                   # [Skv, dk]

        # Contract over d_kv without materializing kh.T.
        s = lax.dot_general(qh, kh,
                            dimension_numbers=(((1,), (1,)), ((), ())),
                            preferred_element_type=jnp.float32)   # [TQ, Skv] f32
        s = s - jnp.max(s, axis=-1, keepdims=True)                # stable softmax (f32)
        p = jnp.exp(s)
        p = p * pl.reciprocal(jnp.sum(p, axis=-1, keepdims=True), approx=True)

        o = jnp.dot(p.astype(mxu_dtype), vh,
                    preferred_element_type=jnp.float32)           # [TQ, dk] f32
        attn_scratch[:, lo:lo + d_kv] = o.astype(attn_scratch.dtype)

    # ---- output projection + residual (residual add in f32) ----
    proj = jnp.dot(attn_scratch[...], wo_ref[...],
                   preferred_element_type=jnp.float32)            # [TQ, H] f32
    out_ref[...] = (x + proj).astype(out_ref.dtype)


# ----------------------------------------------------------------------------
# Wrapper
# ----------------------------------------------------------------------------
def prepare_cross_attention_params(params, *, mxu_dtype=jnp.bfloat16):
    """One-time (load-time) weight prep: transpose Linear weights to [in, out]
    and cast them to the MXU operand dtype. Keep LayerNorm params in f32."""
    H = params["wq"].shape[0]
    return {
        "wqT": jnp.asarray(params["wq"].T, dtype=mxu_dtype),
        "wkT": jnp.asarray(params["wk"].T, dtype=mxu_dtype),
        "wvT": jnp.asarray(params["wv"].T, dtype=mxu_dtype),
        "woT": jnp.asarray(params["wo"].T, dtype=mxu_dtype),
        "ln_weight": jnp.asarray(params["ln_weight"], jnp.float32).reshape(1, H),
        "ln_bias": jnp.asarray(params["ln_bias"], jnp.float32).reshape(1, H),
    }


def _pick_tile(n, max_tile=256):
    """Largest multiple-of-8 tile <= max_tile that divides n, else full extent."""
    if n <= max_tile:
        return n
    for t in range(max_tile - (max_tile % 8), 7, -8):
        if n % t == 0:
            return t
    return n


def _nbytes(dt):
    return jnp.dtype(dt).itemsize


def _vmem_limit(block_bytes, scratch_bytes=0):
    # double-buffered blocks + scratch + headroom, clamped to a safe cross-chip range
    est = 2 * block_bytes + scratch_bytes + (4 << 20)
    return int(min(max(est, 32 << 20), 64 << 20))


def pix2struct_text_layer_cross_attention(hidden_states, key_value_states, prepared,
                                          *, n_heads, d_kv, eps=1e-6):
    """Returns (layer_output, present_key_value_state, position_bias)."""
    B, Sq, H = hidden_states.shape
    _, Skv, _ = key_value_states.shape
    assert H == n_heads * d_kv

    mxu_dtype = prepared["wqT"].dtype
    mxu_b = _nbytes(mxu_dtype)
    hid_b = _nbytes(hidden_states.dtype)
    kv_b = _nbytes(key_value_states.dtype)

    TQ = _pick_tile(Sq)
    TKV = _pick_tile(Skv)

    # -------- kernel 1: K/V projection (once per batch/Skv tile) --------
    kv_block_bytes = (TKV * H * kv_b            # kv input tile
                      + 2 * H * H * mxu_b       # Wk^T, Wv^T
                      + 2 * TKV * H * mxu_b)    # k, v output tiles
    k_proj, v_proj = pl.pallas_call(
        _kv_proj_kernel,
        out_shape=(jax.ShapeDtypeStruct((B, Skv, H), mxu_dtype),
                   jax.ShapeDtypeStruct((B, Skv, H), mxu_dtype)),
        grid_spec=pltpu.PrefetchScalarGridSpec(
            num_scalar_prefetch=0,
            grid=(B, Skv // TKV),
            in_specs=[
                pl.BlockSpec((pl.Squeezed(), TKV, H), lambda b, s: (b, s, 0)),
                pl.BlockSpec((H, H), lambda b, s: (0, 0)),
                pl.BlockSpec((H, H), lambda b, s: (0, 0)),
            ],
            out_specs=[
                pl.BlockSpec((pl.Squeezed(), TKV, H), lambda b, s: (b, s, 0)),
                pl.BlockSpec((pl.Squeezed(), TKV, H), lambda b, s: (b, s, 0)),
            ],
        ),
        compiler_params=pltpu.CompilerParams(
            dimension_semantics=("parallel", "parallel"),
            vmem_limit_bytes=_vmem_limit(kv_block_bytes)),
    )(key_value_states, prepared["wkT"], prepared["wvT"])

    # -------- kernel 2: LN + Q + attention + output proj + residual --------
    attn_block_bytes = (TQ * H * hid_b          # hidden tile
                        + 2 * Skv * H * mxu_b   # projected k, v
                        + 2 * H * 4             # LN weight/bias
                        + 2 * H * H * mxu_b     # Wq^T, Wo^T
                        + TQ * H * hid_b)       # output tile
    attn_scratch_bytes = TQ * H * mxu_b

    kernel = functools.partial(_cross_attn_kernel, n_heads=n_heads, d_kv=d_kv, eps=eps)
    layer_output = pl.pallas_call(
        kernel,
        out_shape=jax.ShapeDtypeStruct((B, Sq, H), hidden_states.dtype),
        grid_spec=pltpu.PrefetchScalarGridSpec(
            num_scalar_prefetch=0,
            grid=(B, Sq // TQ),
            in_specs=[
                pl.BlockSpec((pl.Squeezed(), TQ, H), lambda b, q: (b, q, 0)),    # hidden
                pl.BlockSpec((pl.Squeezed(), Skv, H), lambda b, q: (b, 0, 0)),   # k (projected)
                pl.BlockSpec((pl.Squeezed(), Skv, H), lambda b, q: (b, 0, 0)),   # v (projected)
                pl.BlockSpec((1, H), lambda b, q: (0, 0)),                       # ln weight
                pl.BlockSpec((1, H), lambda b, q: (0, 0)),                       # ln bias
                pl.BlockSpec((H, H), lambda b, q: (0, 0)),                       # Wq^T
                pl.BlockSpec((H, H), lambda b, q: (0, 0)),                       # Wo^T
            ],
            out_specs=pl.BlockSpec((pl.Squeezed(), TQ, H), lambda b, q: (b, q, 0)),
            scratch_shapes=[pltpu.VMEM((TQ, H), mxu_dtype)],                     # attn slab
        ),
        compiler_params=pltpu.CompilerParams(
            dimension_semantics=("parallel", "parallel"),
            vmem_limit_bytes=_vmem_limit(attn_block_bytes, attn_scratch_bytes)),
    )(hidden_states, k_proj, v_proj,
      prepared["ln_weight"], prepared["ln_bias"],
      prepared["wqT"], prepared["woT"])

    # position_bias defaults to zeros in the attention-scores dtype (float32).
    position_bias = jnp.zeros((1, n_heads, Sq, Skv), dtype=jnp.float32)
    present_key_value_state = None  # use_cache=False
    return layer_output, present_key_value_state, position_bias


# ----------------------------------------------------------------------------
# Pure-JAX reference mirroring the PyTorch module (eval mode)
# ----------------------------------------------------------------------------
def _reference(hidden, kv, p, n_heads, d_kv, eps):
    B, Sq, H = hidden.shape
    Skv = kv.shape[1]
    mean = hidden.mean(-1, keepdims=True)
    var = ((hidden - mean) ** 2).mean(-1, keepdims=True)
    normed = (hidden - mean) / jnp.sqrt(var + eps) * p["ln_weight"] + p["ln_bias"]
    q = normed @ p["wq"].T
    k = kv @ p["wk"].T
    v = kv @ p["wv"].T
    qh = q.reshape(B, Sq, n_heads, d_kv).transpose(0, 2, 1, 3)
    kh = k.reshape(B, Skv, n_heads, d_kv).transpose(0, 2, 1, 3)
    vh = v.reshape(B, Skv, n_heads, d_kv).transpose(0, 2, 1, 3)
    s = jnp.einsum("bhqd,bhkd->bhqk", qh, kh)
    w = jax.nn.softmax(s, axis=-1)
    o = jnp.einsum("bhqk,bhkd->bhqd", w, vh)
    o = o.transpose(0, 2, 1, 3).reshape(B, Sq, H)
    return hidden + o @ p["wo"].T


if __name__ == "__main__":
    # Small config consistent with the module: hidden_size = num_heads * d_kv.
    B, Sq, Skv = 2, 8, 16
    n_heads, d_kv = 4, 8
    H = n_heads * d_kv  # 32
    eps = 1e-6

    key = jax.random.PRNGKey(0)
    k_h, k_kv, k_q, k_k, k_v, k_o, k_lw = jax.random.split(key, 7)

    hidden_states = jax.random.normal(k_h, (B, Sq, H), dtype=jnp.float32)
    key_value_states = jax.random.normal(k_kv, (B, Skv, H), dtype=jnp.float32)

    scale = 1.0 / jnp.sqrt(jnp.float32(H))
    params = {
        # nn.Linear weights are [out_features, in_features]
        "wq": jax.random.normal(k_q, (H, H), dtype=jnp.float32) * scale,
        "wk": jax.random.normal(k_k, (H, H), dtype=jnp.float32) * scale,
        "wv": jax.random.normal(k_v, (H, H), dtype=jnp.float32) * scale,
        "wo": jax.random.normal(k_o, (H, H), dtype=jnp.float32) * scale,
        "ln_weight": 1.0 + 0.1 * jax.random.normal(k_lw, (H,), dtype=jnp.float32),
        "ln_bias": jnp.zeros((H,), dtype=jnp.float32),
    }

    ref = _reference(hidden_states, key_value_states, params, n_heads, d_kv, eps)

    # ---- f32 MXU path: structural / numerical check (tight tolerance) ----
    prep_f32 = prepare_cross_attention_params(params, mxu_dtype=jnp.float32)
    out_f32, present_kv, position_bias = pix2struct_text_layer_cross_attention(
        hidden_states, key_value_states, prep_f32, n_heads=n_heads, d_kv=d_kv, eps=eps)
    jax.block_until_ready(out_f32)
    assert jnp.allclose(out_f32, ref, rtol=5e-3, atol=5e-3), "f32-mode mismatch vs reference"

    # ---- bf16 MXU path (default / perf mode): loose tolerance vs f32 reference ----
    prep_bf16 = prepare_cross_attention_params(params)  # mxu_dtype=bf16
    out_bf16, _, _ = pix2struct_text_layer_cross_attention(
        hidden_states, key_value_states, prep_bf16, n_heads=n_heads, d_kv=d_kv, eps=eps)
    jax.block_until_ready(out_bf16)
    assert jnp.allclose(out_bf16, ref, rtol=5e-2, atol=1e-1), "bf16-mode mismatch vs reference"

    assert present_kv is None
    assert position_bias.shape == (1, n_heads, Sq, Skv)
    assert position_bias.dtype == jnp.float32

    print("KERNEL_OK")
</pallas_src>

<mosaic_0001>
module attributes {stable_mosaic.version = 11 : i64} {
  func.func @_kv_proj_kernel(%arg0: i32, %arg1: i32, %arg2: memref<1x16x32xf32, #tpu.memory_space<vmem>>, %arg3: memref<32x32xf32, #tpu.memory_space<vmem>>, %arg4: memref<32x32xf32, #tpu.memory_space<vmem>>, %arg5: memref<1x16x32xf32, #tpu.memory_space<vmem>>, %arg6: memref<1x16x32xf32, #tpu.memory_space<vmem>>) attributes {dimension_semantics = [#tpu.dimension_semantics<parallel>, #tpu.dimension_semantics<parallel>], iteration_bounds = array<i64: 2, 1>, scalar_prefetch = 0 : i64, scratch_operands = 0 : i64, tpu.core_type = #tpu.core_type<tc>, window_params = [{transform_indices = @transform_0, window_bounds = array<i64: 1, 16, 32>}, {pipeline_mode = #tpu.pipeline_mode<synchronous>, transform_indices = @transform_1, window_bounds = array<i64: 32, 32>}, {pipeline_mode = #tpu.pipeline_mode<synchronous>, transform_indices = @transform_2, window_bounds = array<i64: 32, 32>}, {transform_indices = @transform_3, window_bounds = array<i64: 1, 16, 32>}, {transform_indices = @transform_4, window_bounds = array<i64: 1, 16, 32>}]} {
    %c0 = arith.constant 0 : index
    %c0_0 = arith.constant 0 : index
    %c0_1 = arith.constant 0 : index
    %0 = vector.load %arg2[%c0, %c0_0, %c0_1] : memref<1x16x32xf32, #tpu.memory_space<vmem>>, vector<1x16x32xf32>
    %1 = vector.shape_cast %0 : vector<1x16x32xf32> to vector<16x32xf32>
    %c0_2 = arith.constant 0 : index
    %c0_3 = arith.constant 0 : index
    %2 = vector.load %arg3[%c0_2, %c0_3] : memref<32x32xf32, #tpu.memory_space<vmem>>, vector<32x32xf32>
    %cst = arith.constant dense<0.000000e+00> : vector<16x32xf32>
    %3 = tpu.matmul %1, %2, %cst {dimension_numbers = #tpu.dot_dimension_numbers<[1], [0], [0], [1], [0, 0, 1, 1], [], []>} : vector<16x32xf32>, vector<32x32xf32>, vector<16x32xf32> -> vector<16x32xf32>
    %c0_4 = arith.constant 0 : index
    %c0_5 = arith.constant 0 : index
    %c0_6 = arith.constant 0 : index
    %4 = vector.load %arg5[%c0_4, %c0_5, %c0_6] : memref<1x16x32xf32, #tpu.memory_space<vmem>>, vector<1x16x32xf32>
    %5 = vector.shape_cast %4 : vector<1x16x32xf32> to vector<16x32xf32>
    %6 = vector.shape_cast %3 : vector<16x32xf32> to vector<1x16x32xf32>
    tpu.vector_store %arg5[%c0_4, %c0_5, %c0_6], %6 {strides = array<i32>} : memref<1x16x32xf32, #tpu.memory_space<vmem>>, vector<1x16x32xf32>,
    %c0_7 = arith.constant 0 : index
    %c0_8 = arith.constant 0 : index
    %7 = vector.load %arg4[%c0_7, %c0_8] : memref<32x32xf32, #tpu.memory_space<vmem>>, vector<32x32xf32>
    %cst_9 = arith.constant dense<0.000000e+00> : vector<16x32xf32>
    %8 = tpu.matmul %1, %7, %cst_9 {dimension_numbers = #tpu.dot_dimension_numbers<[1], [0], [0], [1], [0, 0, 1, 1], [], []>} : vector<16x32xf32>, vector<32x32xf32>, vector<16x32xf32> -> vector<16x32xf32>
    %c0_10 = arith.constant 0 : index
    %c0_11 = arith.constant 0 : index
    %c0_12 = arith.constant 0 : index
    %9 = vector.load %arg6[%c0_10, %c0_11, %c0_12] : memref<1x16x32xf32, #tpu.memory_space<vmem>>, vector<1x16x32xf32>
    %10 = vector.shape_cast %9 : vector<1x16x32xf32> to vector<16x32xf32>
    %11 = vector.shape_cast %8 : vector<16x32xf32> to vector<1x16x32xf32>
    tpu.vector_store %arg6[%c0_10, %c0_11, %c0_12], %11 {strides = array<i32>} : memref<1x16x32xf32, #tpu.memory_space<vmem>>, vector<1x16x32xf32>,
    return
  }
  func.func @transform_0(%arg0: i32, %arg1: i32) -> (i32, i32, i32) {
    %c0_i32 = arith.constant 0 : i32
    %c0_i32_0 = arith.constant 0 : i32
    return %arg0, %arg1, %c0_i32 : i32, i32, i32
  }
  func.func @transform_1(%arg0: i32, %arg1: i32) -> (i32, i32) {
    %c0_i32 = arith.constant 0 : i32
    %c0_i32_0 = arith.constant 0 : i32
    %c0_i32_1 = arith.constant 0 : i32
    return %c0_i32, %c0_i32_0 : i32, i32
  }
  func.func @transform_2(%arg0: i32, %arg1: i32) -> (i32, i32) {
    %c0_i32 = arith.constant 0 : i32
    %c0_i32_0 = arith.constant 0 : i32
    %c0_i32_1 = arith.constant 0 : i32
    return %c0_i32, %c0_i32_0 : i32, i32
  }
  func.func @transform_3(%arg0: i32, %arg1: i32) -> (i32, i32, i32) {
    %c0_i32 = arith.constant 0 : i32
    %c0_i32_0 = arith.constant 0 : i32
    return %arg0, %arg1, %c0_i32 : i32, i32, i32
  }
  func.func @transform_4(%arg0: i32, %arg1: i32) -> (i32, i32, i32) {
    %c0_i32 = arith.constant 0 : i32
    %c0_i32_0 = arith.constant 0 : i32
    return %arg0, %arg1, %c0_i32 : i32, i32, i32
  }
}

</mosaic_0001>

<llo_original>
// kernel: tpu_custom_call.1
$region0: #{tpu_custom_call.1}
  #allocation0 [shape = 'u32[]', space=smem, size = 0x4, offset = 0x4, fixed_abs, tag = 'smem constant byte address 0x4 - core index']
  #allocation1 [shape = 'u32[144,128]{1,0:T(1,128)}', space=vmem, size = 0x12000, scoped, tag = 'internal scratch']
  %s0 = inlined_call_operand.hbm [shape: f32[2,16,32], index: 0, kind: input, shape index: {}]
  %s1 = inlined_call_operand.hbm [shape: f32[32,32], index: 1, kind: input, shape index: {}]
  %s2 = inlined_call_operand.hbm [shape: f32[32,32], index: 2, kind: input, shape index: {}]
  %s3 = inlined_call_operand.hbm [shape: f32[2,16,32], index: 3, kind: output, shape index: {0}]
  %s4 = inlined_call_operand.hbm [shape: f32[2,16,32], index: 4, kind: output, shape index: {1}]
  %5 = xla_tuple %s3, %s4
  %s6 = sld [smem:[#allocation0]]
  $region65: #{tpu_custom_call.1} parent=0
    _
  %s8 = ssub.s32 1, %s6
  %s9 = scalar_select 0, %s8, %s6
  $region1: #{tpu_custom_call.1} parent=0
    #allocation2 [shape = 'u8[16384]{0}', space=vmem, size = 0x4000, scoped, tag = 'input window, operand 0']
    #allocation3 [shape = 's32[2]{0}', space=sflag, size = 0x8, scoped, tag = 'scoped memory for tpu_custom_call.1']
    #allocation4 [shape = 's32[2]{0}', space=sflag, size = 0x8, scoped, tag = 'scoped memory for tpu_custom_call.1']
    #allocation5 [shape = 'u8[16384]{0}', space=vmem, size = 0x4000, scoped, tag = 'input window, operand 1, single buffered']
    #allocation6 [shape = 's32[1]{0}', space=sflag, size = 0x4, scoped, tag = 'scoped memory for tpu_custom_call.1']
    #allocation7 [shape = 'u8[16384]{0}', space=vmem, size = 0x4000, scoped, tag = 'input window, operand 2, single buffered']
    #allocation8 [shape = 'u8[16384]{0}', space=vmem, size = 0x4000, scoped, tag = 'output window, operand 0']
    #allocation9 [shape = 'u8[16384]{0}', space=vmem, size = 0x4000, scoped, tag = 'output window, operand 1']
    #allocation10 [shape = 's32[2]{0}', space=sflag, size = 0x8, scoped, tag = 'scoped memory for tpu_custom_call.1']
    %10 = vsyncpa [#allocation3], 0
    %s11 = scalar_lea.sflag [#allocation3], 1
    %12 = vsyncpa %s11, 0
    %13 = vsyncpa [#allocation6], 0
    %14 = vsyncpa [#allocation4], 0
    %s15 = scalar_lea.sflag [#allocation4], 1
    %16 = vsyncpa %s15, 0
    %17 = vsyncpa [#allocation10], 0
    %s18 = scalar_lea.sflag [#allocation10], 1
    %19 = vsyncpa %s18, 0
    loop: start=0, step=1, limit=4
    $region2: #{tpu_custom_call.1} parent=1 // loop_pre_header
      _
    $region3: #{tpu_custom_call.1} parent=1 // loop_header
      %s21 = sphi 0, %s25
      %p22 = scmp.ge.s32.totalorder %s21, 4
      %s28 = sphi 0, %s40
      %s29 = sphi 0, %s36
      %s30 = sphi 0, %s28
      %s31 = sphi 0, %s29
      %s32 = sphi 0, %s30
      %s33 = sphi 0, %s31
      %s45 = sphi 0, %s47
      %s48 = sphi 0, %s45
      %s49 = sphi 0, %s48
      %s65 = sphi 0, %s49
      %s69 = sphi 0, %s69
      %s71 = sphi 0, %s69
      %s72 = sphi 0, %s71
      %s86 = sphi 0, %s72
      %s90 = sphi 0, %s90
      %s92 = sphi 0, %s90
      %s93 = sphi 0, %s92
      %s107 = sphi 0, %s93
      %s115 = sphi 0, %s117
      %s118 = sphi 0, %s115
      %s119 = sphi 0, %s118
      %s135 = sphi 0, %s119
      %s143 = sphi 0, %s145
      %s146 = sphi 0, %s143
      %s147 = sphi 0, %s146
      %s163 = sphi 0, %s147
    $region4: #{tpu_custom_call.1} parent=1 // loop_header_branch
      %24 = sbr.rel (%p22) target = $region8
    $region5: #{tpu_custom_call.1} parent=1 // loop_body
      %s26 = ssub.s32 %s21, 1
      %s27 = ssub.s32 %s21, 2
      %s34 = sadd.s32 1, %s29
      %p35 = scmp.ge.s32.totalorder %s34, 1
      %s36 = scalar_select %p35, 0, %s34
      %s37 = sadd.s32 1, %s28
      %s38 = scalar_select %p35, %s37, %s28
      %p39 = scmp.ge.s32.totalorder %s38, 2
      %s40 = scalar_select %p39, 0, %s38
      %s41 = ssub.s32 %s28, %s40
      %s42 = ssub.s32 %s29, %s36
      %s43 = sor.u32 %s41, %s42
      %p44 = scmp.eq.s32.totalorder %s43, 0
      %s46 = sadd.s32 %s45, 1
      %s47 = scalar_select %p44, %s45, %s46
      %p50 = pneg %p44
      %p51 = scmp.eq.s32.totalorder %s21, 1
      %p52 = por %p50, %p51
      %p53 = scmp.ne.s32.totalorder %s45, %s48
      %p54 = scmp.eq.s32.totalorder %s21, 0
      %p55 = por %p53, %p54
      %p56 = scmp.ne.s32.totalorder %s45, %s48
      %p57 = scmp.eq.s32.totalorder %s26, 1
      %p58 = por %p56, %p57
      %p59 = scmp.ne.s32.totalorder %s48, %s49
      %p60 = scmp.eq.s32.totalorder %s26, 0
      %p61 = por %p59, %p60
      %p62 = scmp.ne.s32.totalorder %s48, %s49
      %p63 = scmp.eq.s32.totalorder %s27, 1
      %p64 = por %p62, %p63
      %p66 = scmp.ne.s32.totalorder %s49, %s65
      %p67 = scmp.eq.s32.totalorder %s27, 0
      %p68 = por %p66, %p67
      %s70 = sadd.s32 %s69, 1
      %p73 = scmp.eq.s32.totalorder %s21, 1
      %p74 = scmp.ne.s32.totalorder %s69, %s71
      %p75 = scmp.eq.s32.totalorder %s21, 0
      %p76 = por %p74, %p75
      %p77 = scmp.ne.s32.totalorder %s69, %s71
      %p78 = scmp.eq.s32.totalorder %s26, 1
      %p79 = por %p77, %p78
      %p80 = scmp.ne.s32.totalorder %s71, %s72
      %p81 = scmp.eq.s32.totalorder %s26, 0
      %p82 = por %p80, %p81
      %p83 = scmp.ne.s32.totalorder %s71, %s72
      %p84 = scmp.eq.s32.totalorder %s27, 1
      %p85 = por %p83, %p84
      %p87 = scmp.ne.s32.totalorder %s72, %s86
      %p88 = scmp.eq.s32.totalorder %s27, 0
      %p89 = por %p87, %p88
      %s91 = sadd.s32 %s90, 1
      %p94 = scmp.eq.s32.totalorder %s21, 1
      %p95 = scmp.ne.s32.totalorder %s90, %s92
      %p96 = scmp.eq.s32.totalorder %s21, 0
      %p97 = por %p95, %p96
      %p98 = scmp.ne.s32.totalorder %s90, %s92
      %p99 = scmp.eq.s32.totalorder %s26, 1
      %p100 = por %p98, %p99
      %p101 = scmp.ne.s32.totalorder %s92, %s93
      %p102 = scmp.eq.s32.totalorder %s26, 0
      %p103 = por %p101, %p102
      %p104 = scmp.ne.s32.totalorder %s92, %s93
      %p105 = scmp.eq.s32.totalorder %s27, 1
      %p106 = por %p104, %p105
      %p108 = scmp.ne.s32.totalorder %s93, %s107
      %p109 = scmp.eq.s32.totalorder %s27, 0
      %p110 = por %p108, %p109
      %s111 = ssub.s32 %s28, %s40
      %s112 = ssub.s32 %s29, %s36
      %s113 = sor.u32 %s111, %s112
      %p114 = scmp.eq.s32.totalorder %s113, 0
      %s116 = sadd.s32 %s115, 1
      %s117 = scalar_select %p114, %s115, %s116
      %p120 = pneg %p114
      %p121 = scmp.eq.s32.totalorder %s21, 1
      %p122 = por %p120, %p121
      %p123 = scmp.ne.s32.totalorder %s115, %s118
      %p124 = scmp.eq.s32.totalorder %s21, 0
      %p125 = por %p123, %p124
      %p126 = scmp.ne.s32.totalorder %s115, %s118
      %p127 = scmp.eq.s32.totalorder %s26, 1
      %p128 = por %p126, %p127
      %p129 = scmp.ne.s32.totalorder %s118, %s119
      %p130 = scmp.eq.s32.totalorder %s26, 0
      %p131 = por %p129, %p130
      %p132 = scmp.ne.s32.totalorder %s118, %s119
      %p133 = scmp.eq.s32.totalorder %s27, 1
      %p134 = por %p132, %p133
      %p136 = scmp.ne.s32.totalorder %s119, %s135
      %p137 = scmp.eq.s32.totalorder %s27, 0
      %p138 = por %p136, %p137
      %s139 = ssub.s32 %s28, %s40
      %s140 = ssub.s32 %s29, %s36
      %s141 = sor.u32 %s139, %s140
      %p142 = scmp.eq.s32.totalorder %s141, 0
      %s144 = sadd.s32 %s143, 1
      %s145 = scalar_select %p142, %s143, %s144
      %p148 = pneg %p142
      %p149 = scmp.eq.s32.totalorder %s21, 1
      %p150 = por %p148, %p149
      %p151 = scmp.ne.s32.totalorder %s143, %s146
      %p152 = scmp.eq.s32.totalorder %s21, 0
      %p153 = por %p151, %p152
      %p154 = scmp.ne.s32.totalorder %s143, %s146
      %p155 = scmp.eq.s32.totalorder %s26, 1
      %p156 = por %p154, %p155
      %p157 = scmp.ne.s32.totalorder %s146, %s147
      %p158 = scmp.eq.s32.totalorder %s26, 0
      %p159 = por %p157, %p158
      %p160 = scmp.ne.s32.totalorder %s146, %s147
      %p161 = scmp.eq.s32.totalorder %s27, 1
      %p162 = por %p160, %p161
      %p164 = scmp.ne.s32.totalorder %s147, %s163
      %p165 = scmp.eq.s32.totalorder %s27, 0
      %p166 = por %p164, %p165
      %p167 = scmp.le.s32.totalorder 1, %s21
      %p168 = scmp.lt.s32.totalorder %s21, 3
      %p169 = pnand %p167, %p168
      %p170 = pneg %p169
      // Predicated region
      $region9: #{tpu_custom_call.1} parent=5 // pred_check
        _
      $region10: #{tpu_custom_call.1} parent=5 // pred_check_branch
        %172 = sbr.rel (%p169) target = $region12
      $region11: #{tpu_custom_call.1} parent=5 // pred_region
        %s173 = ssub.s32 %s21, 1
        // Predicated region
        $region13: #{tpu_custom_call.1} parent=11 // pred_check
          %p174 = pneg %p82
        $region14: #{tpu_custom_call.1} parent=11 // pred_check_branch
          %176 = sbr.rel (%p174) target = $region16
        $region15: #{tpu_custom_call.1} parent=11 // pred_region
          %s178 = ssub.s32 512, 512
          %179 = vsyncadd [#allocation6], %s178
          %s180 = sshll.u32 [#allocation5], 4
          %s181 = int_to_ptr.vmem [resolvable:$true] %s180
          %186 = dma.hbm_to_vmem [thread:$0]  %s1, 512, %s181, [#allocation6], 128, 128, 8
        $region16: #{tpu_custom_call.1} parent=11 // pred_fallthru
          _
        // Predicated region
        $region17: #{tpu_custom_call.1} parent=11 // pred_check
          %p187 = pneg %p103
        $region18: #{tpu_custom_call.1} parent=11 // pred_check_branch
          %189 = sbr.rel (%p187) target = $region20
        $region19: #{tpu_custom_call.1} parent=11 // pred_region
          %s191 = ssub.s32 512, 512
          %192 = vsyncadd [#allocation6], %s191
          %s193 = sshll.u32 [#allocation7], 4
          %s194 = int_to_ptr.vmem [resolvable:$true] %s193
          %199 = dma.hbm_to_vmem [thread:$0]  %s2, 512, %s194, [#allocation6], 128, 128, 8
        $region20: #{tpu_custom_call.1} parent=11 // pred_fallthru
          _
      $region12: #{tpu_custom_call.1} parent=5 // pred_fallthru
        _
      %p200 = scmp.lt.s32.totalorder %s21, 2
      // Predicated region
      $region21: #{tpu_custom_call.1} parent=5 // pred_check
        %p201 = pneg %p200
      $region22: #{tpu_custom_call.1} parent=5 // pred_check_branch
        %203 = sbr.rel (%p201) target = $region24
      $region23: #{tpu_custom_call.1} parent=5 // pred_region
        // Predicated region
        $region25: #{tpu_custom_call.1} parent=23 // pred_check
          %p204 = pneg %p55
        $region26: #{tpu_custom_call.1} parent=23 // pred_check_branch
          %206 = sbr.rel (%p204) target = $region28
        $region27: #{tpu_custom_call.1} parent=23 // pred_region
          %s207 = sand.u32 %s45, 1
          %s208 = scalar_lea.sflag [#allocation3], %s207
          %s209 = sand.u32 %s45, 1
          %s210 = smul.addr %s209, 16
          %s211 = scalar_lea.vmem [#allocation2], %s210
          %s212 = smul.u32 2, %s29
          %s214 = ssub.s32 256, 256
          %215 = vsyncadd %s208, %s214
          %s216 = smul.addr %s28, 2
          %s217 = sadd.s32 %s212, %s216
          %s218 = smul.addr %s217, 128
          %s219 = scalar_lea.hbm %s0, %s218
          %s220 = sshll.u32 %s211, 4
          %s221 = int_to_ptr.vmem [resolvable:$true] %s220
          %226 = dma.hbm_to_vmem [thread:$0]  %s219, 256, %s221, %s208, 128, 128, 8
        $region28: #{tpu_custom_call.1} parent=23 // pred_fallthru
          _
      $region24: #{tpu_custom_call.1} parent=5 // pred_fallthru
        _
      %p227 = scmp.le.s32.totalorder 1, %s21
      %p228 = scmp.lt.s32.totalorder %s21, 3
      %p229 = pnand %p227, %p228
      %p230 = pneg %p229
      // Predicated region
      $region29: #{tpu_custom_call.1} parent=5 // pred_check
        _
      $region30: #{tpu_custom_call.1} parent=5 // pred_check_branch
        %232 = sbr.rel (%p229) target = $region32
      $region31: #{tpu_custom_call.1} parent=5 // pred_region
        %s233 = ssub.s32 %s21, 1
        %s234 = sand.u32 %s48, 1
        %s235 = scalar_lea.sflag [#allocation3], %s234
        %s236 = sand.u32 %s48, 1
        %s237 = smul.addr %s236, 16
        %s238 = scalar_lea.vmem [#allocation2], %s237
        // Predicated region
        $region33: #{tpu_custom_call.1} parent=31 // pred_check
          %p239 = pneg %p61
        $region34: #{tpu_custom_call.1} parent=31 // pred_check_branch
          %241 = sbr.rel (%p239) target = $region36
        $region35: #{tpu_custom_call.1} parent=31 // pred_region
          %242 = dma.done %s235, 256
        $region36: #{tpu_custom_call.1} parent=31 // pred_fallthru
          _
        // Predicated region
        $region37: #{tpu_custom_call.1} parent=31 // pred_check
          %p243 = pneg %p82
        $region38: #{tpu_custom_call.1} parent=31 // pred_check_branch
          %245 = sbr.rel (%p243) target = $region40
        $region39: #{tpu_custom_call.1} parent=31 // pred_region
          %246 = dma.done [#allocation6], 512
        $region40: #{tpu_custom_call.1} parent=31 // pred_fallthru
          _
        // Predicated region
        $region41: #{tpu_custom_call.1} parent=31 // pred_check
          %p247 = pneg %p103
        $region42: #{tpu_custom_call.1} parent=31 // pred_check_branch
          %249 = sbr.rel (%p247) target = $region44
        $region43: #{tpu_custom_call.1} parent=31 // pred_region
          %250 = dma.done [#allocation6], 512
        $region44: #{tpu_custom_call.1} parent=31 // pred_fallthru
          _
        %s251 = sand.u32 %s48, 1
        %s252 = scalar_lea.sflag [#allocation3], %s251
        %s253 = sand.u32 %s48, 1
        %s254 = smul.addr %s253, 16
        %s255 = scalar_lea.vmem [#allocation2], %s254
        %p256 = pneg %p61
        %p257 = pneg %p58
        %p258 = pneg %p82
        %p259 = pneg %p79
        %p260 = pneg %p103
        %p261 = pneg %p100
        %p262 = pneg %p131
        %p263 = pneg %p128
        %s264 = sand.u32 %s118, 1
        %s265 = scalar_lea.sflag [#allocation4], %s264
        %s266 = sand.u32 %s118, 1
        %s267 = smul.addr %s266, 16
        %s268 = scalar_lea.vmem [#allocation8], %s267
        %p269 = pneg %p159
        %p270 = pneg %p156
        %s271 = sand.u32 %s146, 1
        %s272 = scalar_lea.sflag [#allocation10], %s271
        %s273 = sand.u32 %s146, 1
        %s274 = smul.addr %s273, 16
        %s275 = scalar_lea.vmem [#allocation9], %s274
        %s276 = smul.u32 2, %s31
        %s277 = smul.u32 2, %s31
        %s278 = smul.u32 2, %s31
        %v279 = vld [vmem:[%s238] sm:$0xff]
        %v280 = vld [vmem:[%s238 + $0x8] sm:$0xff]
        %v281 = vld [vmem:[#allocation5] sm:$0xff]
        %v282 = vld [vmem:[#allocation5 + $0x8] sm:$0xff]
        %v283 = vld [vmem:[#allocation5 + $0x10] sm:$0xff]
        %v284 = vld [vmem:[#allocation5 + $0x18] sm:$0xff]
        %vm285 = vcmask 261120
        %v287 = vsel %vm285, %v279, 0
        %v290 = vsel %vm285, %v280, 0
        %292 = vmatprep.subr.mxu0 0.0
        %293 = vmatpush1.msra.mxu0 %v281
        %294 = vmatprep.subr.mxu0 0.0
        %295 = vmatpush1.msra.mxu0 %v282
        %296 = vmatprep.subr.mxu0 0.0
        %297 = vmatpush1.msra.mxu0 %v283
        %298 = vmatprep.subr.mxu0 0.0
        %299 = vmatpush1.msra.mxu0 %v284
        %300 = vmatprep.subr.mxu0 0.0
        %301 = vmatpush1.msra.mxu0 0.0
        %302 = vmatprep.subr.mxu0 0.0
        %303 = vmatpush1.msra.mxu0 0.0
        %304 = vmatprep.subr.mxu0 0.0
        %305 = vmatpush1.msra.mxu0 0.0
        %306 = vmatprep.subr.mxu0 0.0
        %307 = vmatpush1.msra.mxu0 0.0
        %308 = vmatprep.subr.mxu0 0.0
        %309 = vmatpush1.msra.mxu0 0.0
        %310 = vmatprep.subr.mxu0 0.0
        %311 = vmatpush1.msra.mxu0 0.0
        %312 = vmatprep.subr.mxu0 0.0
        %313 = vmatpush1.msra.mxu0 0.0
        %314 = vmatprep.subr.mxu0 0.0
        %315 = vmatpush1.msra.mxu0 0.0
        %316 = vmatprep.subr.mxu0 0.0
        %317 = vmatpush1.msra.mxu0 0.0
        %318 = vmatprep.subr.mxu0 0.0
        %319 = vmatpush1.msra.mxu0 0.0
        %320 = vmatprep.subr.mxu0 0.0
        %321 = vmatpush1.msra.mxu0 0.0
        %322 = vmatprep.subr.mxu0 0.0
        %323 = vmatpush1.msra.mxu0 0.0
        %324 = vmatprep.subr.mxu0 0.0
        %325 = vmatpush1.msra.mxu0 0.0
        %326 = vmatprep.subr.mxu0 0.0
        %327 = vmatpush1.msra.mxu0 0.0
        %328 = vmatprep.subr.mxu0 0.0
        %329 = vmatpush1.msra.mxu0 0.0
        %330 = vmatprep.subr.mxu0 0.0
        %331 = vmatpush1.msra.mxu0 0.0
        %332 = vmatprep.subr.mxu0 0.0
        %333 = vmatpush1.msra.mxu0 0.0
        %334 = vmatprep.subr.mxu0 0.0
        %335 = vmatpush1.msra.mxu0 0.0
        %336 = vmatprep.subr.mxu0 0.0
        %337 = vmatpush1.msra.mxu0 0.0
        %338 = vmatprep.subr.mxu0 0.0
        %339 = vmatpush1.msra.mxu0 0.0
        %340 = vmatprep.subr.mxu0 0.0
        %341 = vmatpush1.msra.mxu0 0.0
        %342 = vmatprep.subr.mxu0 0.0
        %343 = vmatpush1.msra.mxu0 0.0
        %344 = vmatprep.subr.mxu0 0.0
        %345 = vmatpush1.msra.mxu0 0.0
        %346 = vmatprep.subr.mxu0 0.0
        %347 = vmatpush1.msra.mxu0 0.0
        %348 = vmatprep.subr.mxu0 0.0
        %349 = vmatpush1.msra.mxu0 0.0
        %350 = vmatprep.subr.mxu0 0.0
        %351 = vmatpush1.msra.mxu0 0.0
        %352 = vmatprep.subr.mxu0 0.0
        %353 = vmatpush1.msra.mxu0 0.0
        %354 = vmatprep.subr.mxu0 0.0
        %355 = vmatpush1.msra.mxu0 0.0
        %356 = vmatprep.mubr.f32.mxu0 0.0
        %357 = vmatmul.mubr.f32.gmra.mrb[0].mxu0 %v287
        %v358 = vpop.f32.mrb[0].mxu0
        %v359 = vadd.f32 0.0, %v358
        %v360 = vpop.f32.mrb[0].mxu0
        %361 = vmatprep.mubr.f32.mxu0 0.0
        %362 = vmatmul.mubr.f32.gmra.mrb[0].mxu0 %v290
        %v363 = vpop.f32.mrb[0].mxu0
        %v364 = vadd.f32 0.0, %v363
        %v365 = vpop.f32.mrb[0].mxu0
        %366 = vdwg.mxu0
        %367 = vst.msk [vmem:[%s268] sm:$0xff] %vm285, %v359
        %368 = vst.msk [vmem:[%s268 + $0x8] sm:$0xff] %vm285, %v364
        %v369 = vld [vmem:[#allocation7] sm:$0xff]
        %v370 = vld [vmem:[#allocation7 + $0x8] sm:$0xff]
        %v371 = vld [vmem:[#allocation7 + $0x10] sm:$0xff]
        %v372 = vld [vmem:[#allocation7 + $0x18] sm:$0xff]
        %373 = vmatprep.subr.mxu0 0.0
        %374 = vmatpush1.msra.mxu0 %v369
        %375 = vmatprep.subr.mxu0 0.0
        %376 = vmatpush1.msra.mxu0 %v370
        %377 = vmatprep.subr.mxu0 0.0
        %378 = vmatpush1.msra.mxu0 %v371
        %379 = vmatprep.subr.mxu0 0.0
        %380 = vmatpush1.msra.mxu0 %v372
        %381 = vmatprep.subr.mxu0 0.0
        %382 = vmatpush1.msra.mxu0 0.0
        %383 = vmatprep.subr.mxu0 0.0
        %384 = vmatpush1.msra.mxu0 0.0
        %385 = vmatprep.subr.mxu0 0.0
        %386 = vmatpush1.msra.mxu0 0.0
        %387 = vmatprep.subr.mxu0 0.0
        %388 = vmatpush1.msra.mxu0 0.0
        %389 = vmatprep.subr.mxu0 0.0
        %390 = vmatpush1.msra.mxu0 0.0
        %391 = vmatprep.subr.mxu0 0.0
        %392 = vmatpush1.msra.mxu0 0.0
        %393 = vmatprep.subr.mxu0 0.0
        %394 = vmatpush1.msra.mxu0 0.0
        %395 = vmatprep.subr.mxu0 0.0
        %396 = vmatpush1.msra.mxu0 0.0
        %397 = vmatprep.subr.mxu0 0.0
        %398 = vmatpush1.msra.mxu0 0.0
        %399 = vmatprep.subr.mxu0 0.0
        %400 = vmatpush1.msra.mxu0 0.0
        %401 = vmatprep.subr.mxu0 0.0
        %402 = vmatpush1.msra.mxu0 0.0
        %403 = vmatprep.subr.mxu0 0.0
        %404 = vmatpush1.msra.mxu0 0.0
        %405 = vmatprep.subr.mxu0 0.0
        %406 = vmatpush1.msra.mxu0 0.0
        %407 = vmatprep.subr.mxu0 0.0
        %408 = vmatpush1.msra.mxu0 0.0
        %409 = vmatprep.subr.mxu0 0.0
        %410 = vmatpush1.msra.mxu0 0.0
        %411 = vmatprep.subr.mxu0 0.0
        %412 = vmatpush1.msra.mxu0 0.0
        %413 = vmatprep.subr.mxu0 0.0
        %414 = vmatpush1.msra.mxu0 0.0
        %415 = vmatprep.subr.mxu0 0.0
        %416 = vmatpush1.msra.mxu0 0.0
        %417 = vmatprep.subr.mxu0 0.0
        %418 = vmatpush1.msra.mxu0 0.0
        %419 = vmatprep.subr.mxu0 0.0
        %420 = vmatpush1.msra.mxu0 0.0
        %421 = vmatprep.subr.mxu0 0.0
        %422 = vmatpush1.msra.mxu0 0.0
        %423 = vmatprep.subr.mxu0 0.0
        %424 = vmatpush1.msra.mxu0 0.0
        %425 = vmatprep.subr.mxu0 0.0
        %426 = vmatpush1.msra.mxu0 0.0
        %427 = vmatprep.subr.mxu0 0.0
        %428 = vmatpush1.msra.mxu0 0.0
        %429 = vmatprep.subr.mxu0 0.0
        %430 = vmatpush1.msra.mxu0 0.0
        %431 = vmatprep.subr.mxu0 0.0
        %432 = vmatpush1.msra.mxu0 0.0
        %433 = vmatprep.subr.mxu0 0.0
        %434 = vmatpush1.msra.mxu0 0.0
        %435 = vmatprep.subr.mxu0 0.0
        %436 = vmatpush1.msra.mxu0 0.0
        %437 = vmatprep.mubr.f32.mxu0 0.0
        %438 = vmatmul.mubr.f32.gmra.mrb[0].mxu0 %v287
        %v439 = vpop.f32.mrb[0].mxu0
        %v440 = vadd.f32 0.0, %v439
        %v441 = vpop.f32.mrb[0].mxu0
        %442 = vmatprep.mubr.f32.mxu0 0.0
        %443 = vmatmul.mubr.f32.gmra.mrb[0].mxu0 %v290
        %v444 = vpop.f32.mrb[0].mxu0
        %v445 = vadd.f32 0.0, %v444
        %v446 = vpop.f32.mrb[0].mxu0
        %447 = vdwg.mxu0
        %448 = vst.msk [vmem:[%s275] sm:$0xff] %vm285, %v440
        %449 = vst.msk [vmem:[%s275 + $0x8] sm:$0xff] %vm285, %v445
        %s450 = sand.u32 %s118, 1
        %s451 = scalar_lea.sflag [#allocation4], %s450
        %s452 = sand.u32 %s118, 1
        %s453 = smul.addr %s452, 16
        %s454 = scalar_lea.vmem [#allocation8], %s453
        %s455 = sand.u32 %s146, 1
        %s456 = scalar_lea.sflag [#allocation10], %s455
        %s457 = sand.u32 %s146, 1
        %s458 = smul.addr %s457, 16
        %s459 = scalar_lea.vmem [#allocation9], %s458
        // Predicated region
        $region45: #{tpu_custom_call.1} parent=31 // pred_check
          %p460 = pneg %p128
        $region46: #{tpu_custom_call.1} parent=31 // pred_check_branch
          %462 = sbr.rel (%p460) target = $region48
        $region47: #{tpu_custom_call.1} parent=31 // pred_region
          %s463 = smul.u32 2, %s31
          %s465 = ssub.s32 256, 256
          %466 = vsyncadd %s451, %s465
          %s467 = smul.addr %s30, 2
          %s468 = sadd.s32 %s463, %s467
          %s469 = smul.addr %s468, 128
          %s470 = scalar_lea.hbm %s3, %s469
          %s471 = sshll.u32 %s454, 4
          %s472 = int_to_ptr.vmem [resolvable:$true] %s471
          %477 = dma.vmem_to_hbm [thread:$0]  %s472, 256, %s470, %s451, 128, 128, 8
        $region48: #{tpu_custom_call.1} parent=31 // pred_fallthru
          _
        // Predicated region
        $region49: #{tpu_custom_call.1} parent=31 // pred_check
          %p478 = pneg %p156
        $region50: #{tpu_custom_call.1} parent=31 // pred_check_branch
          %480 = sbr.rel (%p478) target = $region52
        $region51: #{tpu_custom_call.1} parent=31 // pred_region
          %s481 = smul.u32 2, %s31
          %s483 = ssub.s32 256, 256
          %484 = vsyncadd %s456, %s483
          %s485 = smul.addr %s30, 2
          %s486 = sadd.s32 %s481, %s485
          %s487 = smul.addr %s486, 128
          %s488 = scalar_lea.hbm %s4, %s487
          %s489 = sshll.u32 %s459, 4
          %s490 = int_to_ptr.vmem [resolvable:$true] %s489
          %495 = dma.vmem_to_hbm [thread:$0]  %s490, 256, %s488, %s456, 128, 128, 8
        $region52: #{tpu_custom_call.1} parent=31 // pred_fallthru
          _
      $region32: #{tpu_custom_call.1} parent=5 // pred_fallthru
        _
      %p496 = scmp.le.s32.totalorder 2, %s21
      // Predicated region
      $region53: #{tpu_custom_call.1} parent=5 // pred_check
        %p497 = pneg %p496
      $region54: #{tpu_custom_call.1} parent=5 // pred_check_branch
        %499 = sbr.rel (%p497) target = $region56
      $region55: #{tpu_custom_call.1} parent=5 // pred_region
        %s500 = ssub.s32 %s21, 2
        // Predicated region
        $region57: #{tpu_custom_call.1} parent=55 // pred_check
          %p501 = pneg %p134
        $region58: #{tpu_custom_call.1} parent=55 // pred_check_branch
          %503 = sbr.rel (%p501) target = $region60
        $region59: #{tpu_custom_call.1} parent=55 // pred_region
          %s504 = sand.u32 %s119, 1
          %s505 = scalar_lea.sflag [#allocation4], %s504
          %s506 = sand.u32 %s119, 1
          %s507 = smul.addr %s506, 16
          %s508 = scalar_lea.vmem [#allocation8], %s507
          %509 = dma.done %s505, 256
        $region60: #{tpu_custom_call.1} parent=55 // pred_fallthru
          _
        // Predicated region
        $region61: #{tpu_custom_call.1} parent=55 // pred_check
          %p510 = pneg %p162
        $region62: #{tpu_custom_call.1} parent=55 // pred_check_branch
          %512 = sbr.rel (%p510) target = $region64
        $region63: #{tpu_custom_call.1} parent=55 // pred_region
          %s513 = sand.u32 %s147, 1
          %s514 = scalar_lea.sflag [#allocation10], %s513
          %s515 = sand.u32 %s147, 1
          %s516 = smul.addr %s515, 16
          %s517 = scalar_lea.vmem [#allocation9], %s516
          %518 = dma.done %s514, 256
        $region64: #{tpu_custom_call.1} parent=55 // pred_fallthru
          _
      $region56: #{tpu_custom_call.1} parent=5 // pred_fallthru
        _
    $region6: #{tpu_custom_call.1} parent=1 // loop_footer
      %s25 = sadd.s32 1, %s21
    $region7: #{tpu_custom_call.1} parent=1 // loop_footer_branch
      %20 = sbr.rel target = $region3
    $region8: #{tpu_custom_call.1} parent=1 // loop_exit
      _
    %519 = vsyncpa [#allocation3], 1
    %s520 = scalar_lea.sflag [#allocation3], 1
    %521 = vsyncpa %s520, 1
    %522 = vsyncpa [#allocation6], 1
    %523 = vsyncpa [#allocation4], 1
    %s524 = scalar_lea.sflag [#allocation4], 1
    %525 = vsyncpa %s524, 1
    %526 = vsyncpa [#allocation10], 1
    %s527 = scalar_lea.sflag [#allocation10], 1
    %528 = vsyncpa %s527, 1

</llo_original>
